<compile_context>
chip_gen: v7x
topology: tpu7x:2x2x1
jax: 0.10.0
libtpu: 0.0.40
codegen_flags: <defaults>
</compile_context>

<pallas_src>
import functools

import jax
import jax.numpy as jnp
from jax.experimental import pallas as pl
from jax.experimental.pallas import tpu as pltpu

# Pendulum-v0: state_dim = 3, action_dim = 1, hidden_dim = 64.
STATE_DIM = 3
ACTION_DIM = 1
HIDDEN_DIM = 64
LANE = 128  # TPU lane width; hidden dim padded up to a multiple of this.


def _round_up(n, m):
    return ((n + m - 1) // m) * m


def qvaluenet_kernel(x_ref, a_ref, w1x_ref, w1a_ref, b1_ref,
                     w2_ref, b2_ref, w3t_ref, b3_ref, out_ref):
    """One batch tile: x (TB, STATE_DIM), a (TB, ACTION_DIM) -> out (TB, 1)."""
    x = x_ref[...]                                   # (TB, STATE_DIM)
    a = a_ref[...]                                   # (TB, ACTION_DIM)

    # ---- fc1 + ReLU on the VPU (K = 4: cheaper than an MXU round trip) -----
    h1 = a * w1a_ref[...] + b1_ref[...]              # (TB,1)*(1,Hp) + (1,Hp)
    for k in range(STATE_DIM):                       # unrolled at trace time
        h1 = h1 + x[:, k:k + 1] * w1x_ref[k:k + 1, :]
    h1 = jnp.maximum(h1, 0.0)                        # (TB, Hp)

    # ---- fc2 + ReLU: the only real matmul (Hp x Hp) -> MXU ------------------
    h2 = jnp.dot(h1, w2_ref[...], preferred_element_type=jnp.float32)
    h2 = jnp.maximum(h2 + b2_ref[...], 0.0)          # (TB, Hp)

    # ---- fc_out (N = 1) on VPU mul + XLU lane reduce (skip second MXU pass) -
    out = jnp.sum(h2 * w3t_ref[...], axis=1, keepdims=True) + b3_ref[0, 0]
    out_ref[...] = out                               # (TB, 1)


@functools.partial(jax.jit, static_argnames=("block_b",))
def qvaluenet_forward(x, a, params, *, block_b=512):
    """x: (B, STATE_DIM), a: (B, ACTION_DIM) -> (B, 1)."""
    w1x, w1a, b1, w2, b2, w3t, b3 = params
    B = x.shape[0]

    # Batch tile: multiple of 8 sublanes, capped at block_b. A ragged last
    # tile is handled by Pallas boundary masking (no host-side padding).
    TB = int(min(block_b, _round_up(B, 8)))
    grid = (pl.cdiv(B, TB),)

    # Weights: constant block index -> fetched once, VMEM-resident.
    resident = lambda arr: pl.BlockSpec(arr.shape, lambda i: (0, 0))

    out = pl.pallas_call(
        qvaluenet_kernel,
        out_shape=jax.ShapeDtypeStruct((B, 1), jnp.float32),
        grid=grid,
        in_specs=[
            pl.BlockSpec((TB, STATE_DIM), lambda i: (i, 0)),    # x tile
            pl.BlockSpec((TB, ACTION_DIM), lambda i: (i, 0)),   # a tile
            resident(w1x), resident(w1a), resident(b1),
            resident(w2), resident(b2), resident(w3t),
            pl.BlockSpec(memory_space=pltpu.MemorySpace.SMEM),  # b3 scalar
        ],
        out_specs=pl.BlockSpec((TB, 1), lambda i: (i, 0)),
        compiler_params=pltpu.CompilerParams(
            dimension_semantics=("parallel",)),                 # v7x: 2 TCs
    )(x, a, w1x, w1a, b1, w2, b2, w3t, b3)
    return out


def init_raw_params(key):
    """torch.nn.Linear-style init; weights stored (in_features, out_features)."""
    dims = [(STATE_DIM + ACTION_DIM, HIDDEN_DIM),
            (HIDDEN_DIM, HIDDEN_DIM),
            (HIDDEN_DIM, 1)]
    keys = jax.random.split(key, 2 * len(dims))
    params = []
    for i, (fan_in, fan_out) in enumerate(dims):
        bound = 1.0 / float(fan_in) ** 0.5
        w = jax.random.uniform(keys[2 * i], (fan_in, fan_out),
                               minval=-bound, maxval=bound, dtype=jnp.float32)
        b = jax.random.uniform(keys[2 * i + 1], (fan_out,),
                               minval=-bound, maxval=bound, dtype=jnp.float32)
        params += [w, b]
    return tuple(params)


def pack_params(raw_params):
    """Split fc1 by input, transpose fc_out, zero-pad hidden dim to 128 lanes."""
    w1, b1, w2, b2, w3, b3 = raw_params
    H = w1.shape[1]
    Hp = _round_up(H, LANE)
    w1p = jnp.zeros((STATE_DIM + ACTION_DIM, Hp), jnp.float32).at[:, :H].set(w1)
    w1x = w1p[:STATE_DIM, :]                         # (STATE_DIM, Hp)
    w1a = w1p[STATE_DIM:, :]                         # (ACTION_DIM, Hp)
    b1p = jnp.zeros((1, Hp), jnp.float32).at[0, :H].set(b1)
    w2p = jnp.zeros((Hp, Hp), jnp.float32).at[:H, :H].set(w2)
    b2p = jnp.zeros((1, Hp), jnp.float32).at[0, :H].set(b2)
    w3t = jnp.zeros((1, Hp), jnp.float32).at[0, :H].set(w3[:, 0])
    b3p = b3.reshape(1, 1).astype(jnp.float32)       # SMEM scalar
    return w1x, w1a, b1p, w2p, b2p, w3t, b3p


def qvaluenet_reference(x, a, raw_params):
    w1, b1, w2, b2, w3, b3 = raw_params
    hp = jax.lax.Precision.HIGHEST
    cat = jnp.concatenate([x, a], axis=1)
    h1 = jnp.maximum(jnp.dot(cat, w1, precision=hp) + b1, 0.0)
    h2 = jnp.maximum(jnp.dot(h1, w2, precision=hp) + b2, 0.0)
    return jnp.dot(h2, w3, precision=hp) + b3


if __name__ == "__main__":
    key = jax.random.PRNGKey(0)
    k_params, k_x, k_a, k_x2, k_a2 = jax.random.split(key, 5)

    raw_params = init_raw_params(k_params)
    params = pack_params(raw_params)

    # Small sanity check (single tile).
    B = 8
    x = jax.random.normal(k_x, (B, STATE_DIM), dtype=jnp.float32)
    a = jax.random.normal(k_a, (B, ACTION_DIM), dtype=jnp.float32)
    out = jax.block_until_ready(qvaluenet_forward(x, a, params))
    ref = qvaluenet_reference(x, a, raw_params)
    assert out.shape == (B, 1), out.shape
    assert jnp.allclose(out, ref, atol=1e-4, rtol=1e-4), (out, ref)

    # Multi-step grid + ragged (masked) boundary tile, still small shapes.
    B2 = 200
    x2 = jax.random.normal(k_x2, (B2, STATE_DIM), dtype=jnp.float32)
    a2 = jax.random.normal(k_a2, (B2, ACTION_DIM), dtype=jnp.float32)
    out2 = jax.block_until_ready(qvaluenet_forward(x2, a2, params, block_b=128))
    ref2 = qvaluenet_reference(x2, a2, raw_params)
    assert out2.shape == (B2, 1), out2.shape
    assert jnp.allclose(out2, ref2, atol=1e-4, rtol=1e-4), (out2, ref2)

    print("KERNEL_OK")
</pallas_src>

<mosaic_0001>
module attributes {stable_mosaic.version = 11 : i64} {
  func.func @qvaluenet_kernel(%arg0: i32, %arg1: memref<8x3xf32, #tpu.memory_space<vmem>>, %arg2: memref<8x1xf32, #tpu.memory_space<vmem>>, %arg3: memref<3x128xf32, #tpu.memory_space<vmem>>, %arg4: memref<1x128xf32, #tpu.memory_space<vmem>>, %arg5: memref<1x128xf32, #tpu.memory_space<vmem>>, %arg6: memref<128x128xf32, #tpu.memory_space<vmem>>, %arg7: memref<1x128xf32, #tpu.memory_space<vmem>>, %arg8: memref<1x128xf32, #tpu.memory_space<vmem>>, %arg9: memref<1x1xf32, #tpu.memory_space<smem>>, %arg10: memref<8x1xf32, #tpu.memory_space<vmem>>) attributes {dimension_semantics = [#tpu.dimension_semantics<parallel>], iteration_bounds = array<i64: 1>, scalar_prefetch = 0 : i64, scratch_operands = 0 : i64, tpu.core_type = #tpu.core_type<tc>, window_params = [{transform_indices = @transform_0, window_bounds = array<i64: 8, 3>}, {transform_indices = @transform_1, window_bounds = array<i64: 8, 1>}, {pipeline_mode = #tpu.pipeline_mode<synchronous>, transform_indices = @transform_2, window_bounds = array<i64: 3, 128>}, {pipeline_mode = #tpu.pipeline_mode<synchronous>, transform_indices = @transform_3, window_bounds = array<i64: 1, 128>}, {pipeline_mode = #tpu.pipeline_mode<synchronous>, transform_indices = @transform_4, window_bounds = array<i64: 1, 128>}, {pipeline_mode = #tpu.pipeline_mode<synchronous>, transform_indices = @transform_5, window_bounds = array<i64: 128, 128>}, {pipeline_mode = #tpu.pipeline_mode<synchronous>, transform_indices = @transform_6, window_bounds = array<i64: 1, 128>}, {pipeline_mode = #tpu.pipeline_mode<synchronous>, transform_indices = @transform_7, window_bounds = array<i64: 1, 128>}, {transform_indices = @transform_8, window_bounds = array<i64: 1, 1>}, {transform_indices = @transform_9, window_bounds = array<i64: 8, 1>}]} {
    %c0 = arith.constant 0 : index
    %c0_0 = arith.constant 0 : index
    %0 = vector.load %arg1[%c0, %c0_0] : memref<8x3xf32, #tpu.memory_space<vmem>>, vector<8x3xf32>
    %c0_1 = arith.constant 0 : index
    %c0_2 = arith.constant 0 : index
    %1 = vector.load %arg2[%c0_1, %c0_2] : memref<8x1xf32, #tpu.memory_space<vmem>>, vector<8x1xf32>
    %c0_3 = arith.constant 0 : index
    %c0_4 = arith.constant 0 : index
    %2 = vector.load %arg4[%c0_3, %c0_4] : memref<1x128xf32, #tpu.memory_space<vmem>>, vector<1x128xf32>
    %3 = vector.broadcast %1 : vector<8x1xf32> to vector<8x128xf32>
    %4 = vector.broadcast %2 : vector<1x128xf32> to vector<8x128xf32>
    %5 = arith.mulf %3, %4 : vector<8x128xf32>
    %c0_5 = arith.constant 0 : index
    %c0_6 = arith.constant 0 : index
    %6 = vector.load %arg5[%c0_5, %c0_6] : memref<1x128xf32, #tpu.memory_space<vmem>>, vector<1x128xf32>
    %7 = vector.broadcast %6 : vector<1x128xf32> to vector<8x128xf32>
    %8 = arith.addf %5, %7 : vector<8x128xf32>
    %9 = vector.extract_strided_slice %0 {offsets = [0, 0], sizes = [8, 1], strides = [1, 1]} : vector<8x3xf32> to vector<8x1xf32>
    %c0_7 = arith.constant 0 : index
    %c0_8 = arith.constant 0 : index
    %10 = vector.load %arg3[%c0_7, %c0_8] : memref<3x128xf32, #tpu.memory_space<vmem>>, vector<1x128xf32>
    %11 = vector.broadcast %9 : vector<8x1xf32> to vector<8x128xf32>
    %12 = vector.broadcast %10 : vector<1x128xf32> to vector<8x128xf32>
    %13 = arith.mulf %11, %12 : vector<8x128xf32>
    %14 = arith.addf %8, %13 : vector<8x128xf32>
    %15 = vector.extract_strided_slice %0 {offsets = [0, 1], sizes = [8, 1], strides = [1, 1]} : vector<8x3xf32> to vector<8x1xf32>
    %c1 = arith.constant 1 : index
    %c0_9 = arith.constant 0 : index
    %16 = vector.load %arg3[%c1, %c0_9] : memref<3x128xf32, #tpu.memory_space<vmem>>, vector<1x128xf32>
    %17 = vector.broadcast %15 : vector<8x1xf32> to vector<8x128xf32>
    %18 = vector.broadcast %16 : vector<1x128xf32> to vector<8x128xf32>
    %19 = arith.mulf %17, %18 : vector<8x128xf32>
    %20 = arith.addf %14, %19 : vector<8x128xf32>
    %21 = vector.extract_strided_slice %0 {offsets = [0, 2], sizes = [8, 1], strides = [1, 1]} : vector<8x3xf32> to vector<8x1xf32>
    %c2 = arith.constant 2 : index
    %c0_10 = arith.constant 0 : index
    %22 = vector.load %arg3[%c2, %c0_10] : memref<3x128xf32, #tpu.memory_space<vmem>>, vector<1x128xf32>
    %23 = vector.broadcast %21 : vector<8x1xf32> to vector<8x128xf32>
    %24 = vector.broadcast %22 : vector<1x128xf32> to vector<8x128xf32>
    %25 = arith.mulf %23, %24 : vector<8x128xf32>
    %26 = arith.addf %20, %25 : vector<8x128xf32>
    %cst = arith.constant 0.000000e+00 : f32
    %27 = vector.broadcast %cst : f32 to vector<8x128xf32>
    %28 = arith.maximumf %26, %27 : vector<8x128xf32>
    %c0_11 = arith.constant 0 : index
    %c0_12 = arith.constant 0 : index
    %29 = vector.load %arg6[%c0_11, %c0_12] : memref<128x128xf32, #tpu.memory_space<vmem>>, vector<128x128xf32>
    %cst_13 = arith.constant dense<0.000000e+00> : vector<8x128xf32>
    %30 = tpu.matmul %28, %29, %cst_13 {dimension_numbers = #tpu.dot_dimension_numbers<[1], [0], [0], [1], [0, 0, 1, 1], [], []>} : vector<8x128xf32>, vector<128x128xf32>, vector<8x128xf32> -> vector<8x128xf32>
    %c0_14 = arith.constant 0 : index
    %c0_15 = arith.constant 0 : index
    %31 = vector.load %arg7[%c0_14, %c0_15] : memref<1x128xf32, #tpu.memory_space<vmem>>, vector<1x128xf32>
    %32 = vector.broadcast %31 : vector<1x128xf32> to vector<8x128xf32>
    %33 = arith.addf %30, %32 : vector<8x128xf32>
    %cst_16 = arith.constant 0.000000e+00 : f32
    %34 = vector.broadcast %cst_16 : f32 to vector<8x128xf32>
    %35 = arith.maximumf %33, %34 : vector<8x128xf32>
    %c0_17 = arith.constant 0 : index
    %c0_18 = arith.constant 0 : index
    %36 = vector.load %arg8[%c0_17, %c0_18] : memref<1x128xf32, #tpu.memory_space<vmem>>, vector<1x128xf32>
    %37 = vector.broadcast %36 : vector<1x128xf32> to vector<8x128xf32>
    %38 = arith.mulf %35, %37 : vector<8x128xf32>
    %cst_19 = arith.constant dense<0.000000e+00> : vector<8xf32>
    %39 = vector.multi_reduction <add>, %38, %cst_19 [1] : vector<8x128xf32> to vector<8xf32>
    %40 = vector.shape_cast %39 : vector<8xf32> to vector<8x1xf32>
    %c0_20 = arith.constant 0 : index
    %c0_21 = arith.constant 0 : index
    %41 = memref.load %arg9[%c0_20, %c0_21] : memref<1x1xf32, #tpu.memory_space<smem>>
    %42 = vector.broadcast %41 : f32 to vector<8x1xf32>
    %43 = arith.addf %40, %42 : vector<8x1xf32>
    %c0_22 = arith.constant 0 : index
    %c0_23 = arith.constant 0 : index
    %44 = vector.load %arg10[%c0_22, %c0_23] : memref<8x1xf32, #tpu.memory_space<vmem>>, vector<8x1xf32>
    tpu.vector_store %arg10[%c0_22, %c0_23], %43 {strides = array<i32>} : memref<8x1xf32, #tpu.memory_space<vmem>>, vector<8x1xf32>,
    return
  }
  func.func @transform_0(%arg0: i32) -> (i32, i32) {
    %c0_i32 = arith.constant 0 : i32
    %c0_i32_0 = arith.constant 0 : i32
    return %arg0, %c0_i32 : i32, i32
  }
  func.func @transform_1(%arg0: i32) -> (i32, i32) {
    %c0_i32 = arith.constant 0 : i32
    %c0_i32_0 = arith.constant 0 : i32
    return %arg0, %c0_i32 : i32, i32
  }
  func.func @transform_2(%arg0: i32) -> (i32, i32) {
    %c0_i32 = arith.constant 0 : i32
    %c0_i32_0 = arith.constant 0 : i32
    %c0_i32_1 = arith.constant 0 : i32
    return %c0_i32, %c0_i32_0 : i32, i32
  }
  func.func @transform_3(%arg0: i32) -> (i32, i32) {
    %c0_i32 = arith.constant 0 : i32
    %c0_i32_0 = arith.constant 0 : i32
    %c0_i32_1 = arith.constant 0 : i32
    return %c0_i32, %c0_i32_0 : i32, i32
  }
  func.func @transform_4(%arg0: i32) -> (i32, i32) {
    %c0_i32 = arith.constant 0 : i32
    %c0_i32_0 = arith.constant 0 : i32
    %c0_i32_1 = arith.constant 0 : i32
    return %c0_i32, %c0_i32_0 : i32, i32
  }
  func.func @transform_5(%arg0: i32) -> (i32, i32) {
    %c0_i32 = arith.constant 0 : i32
    %c0_i32_0 = arith.constant 0 : i32
    %c0_i32_1 = arith.constant 0 : i32
    return %c0_i32, %c0_i32_0 : i32, i32
  }
  func.func @transform_6(%arg0: i32) -> (i32, i32) {
    %c0_i32 = arith.constant 0 : i32
    %c0_i32_0 = arith.constant 0 : i32
    %c0_i32_1 = arith.constant 0 : i32
    return %c0_i32, %c0_i32_0 : i32, i32
  }
  func.func @transform_7(%arg0: i32) -> (i32, i32) {
    %c0_i32 = arith.constant 0 : i32
    %c0_i32_0 = arith.constant 0 : i32
    %c0_i32_1 = arith.constant 0 : i32
    return %c0_i32, %c0_i32_0 : i32, i32
  }
  func.func @transform_8(%arg0: i32) -> (i32, i32) {
    %c0_i32 = arith.constant 0 : i32
    %c0_i32_0 = arith.constant 0 : i32
    %c0_i32_1 = arith.constant 0 : i32
    return %c0_i32, %c0_i32_0 : i32, i32
  }
  func.func @transform_9(%arg0: i32) -> (i32, i32) {
    %c0_i32 = arith.constant 0 : i32
    %c0_i32_0 = arith.constant 0 : i32
    return %arg0, %c0_i32 : i32, i32
  }
}

</mosaic_0001>

<llo_original>
// kernel: qvaluenet_forward.1
$region0: #{qvaluenet_forward.1}
  #allocation0 [shape = 'u32[]', space=smem, size = 0x4, offset = 0x4, fixed_abs, tag = 'smem constant byte address 0x4 - core index']
  #allocation1 [shape = 'u32[144,128]{1,0:T(1,128)}', space=vmem, size = 0x12000, scoped, tag = 'internal scratch']
  #allocation2 [shape = 'f32[1,1]{1,0:T(1,128)S(6)}', space=smem, size = 0x200, scoped, tag = 'scoped memory for qvaluenet_forward.1']
  %s0 = inlined_call_operand.vmem [shape: f32[8,3], index: 0, kind: input, shape index: {}]
  %s1 = inlined_call_operand.vmem [shape: f32[8,1], index: 1, kind: input, shape index: {}]
  %s2 = inlined_call_operand.vmem [shape: f32[3,128], index: 2, kind: input, shape index: {}]
  %s3 = inlined_call_operand.vmem [shape: f32[1,128], index: 3, kind: input, shape index: {}]
  %s4 = inlined_call_operand.vmem [shape: f32[1,128], index: 4, kind: input, shape index: {}]
  %s5 = inlined_call_operand.hbm [shape: f32[128,128], index: 5, kind: input, shape index: {}]
  %s6 = inlined_call_operand.vmem [shape: f32[1,128], index: 6, kind: input, shape index: {}]
  %s7 = inlined_call_operand.vmem [shape: f32[1,128], index: 7, kind: input, shape index: {}]
  %s8 = inlined_call_operand.<no memory space> [shape: f32[1,1], index: 8, kind: input, shape index: {}]
  %s9 = inlined_call_operand.vmem [shape: f32[8,1], index: 9, kind: output, shape index: {}]
  %s10 = sld [smem:[#allocation0]]
  $region50: #{qvaluenet_forward.1} parent=0
    _
  %s12 = ssub.s32 1, %s10
  %s13 = scalar_select 0, %s12, %s10
  %14 = sst [smem:[#allocation2]] %s8
  $region1: #{qvaluenet_forward.1} parent=0
    #allocation3 [shape = 'u8[65536]{0}', space=vmem, size = 0x10000, scoped, tag = 'input window, operand 5, single buffered']
    #allocation4 [shape = 's32[1]{0}', space=sflag, size = 0x4, scoped, tag = 'scoped memory for qvaluenet_forward.1']
    %15 = vsyncpa [#allocation4], 0
    // Predicated region
    $region2: #{qvaluenet_forward.1} parent=1 // pred_check
      _
    $region3: #{qvaluenet_forward.1} parent=1 // pred_check_branch
      %17 = sbr.rel (0) target = $region5
    $region4: #{qvaluenet_forward.1} parent=1 // pred_region
      _
    $region5: #{qvaluenet_forward.1} parent=1 // pred_fallthru
      _
    // Predicated region
    $region6: #{qvaluenet_forward.1} parent=1 // pred_check
      _
    $region7: #{qvaluenet_forward.1} parent=1 // pred_check_branch
      %19 = sbr.rel (0) target = $region9
    $region8: #{qvaluenet_forward.1} parent=1 // pred_region
      _
    $region9: #{qvaluenet_forward.1} parent=1 // pred_fallthru
      _
    // Predicated region
    $region10: #{qvaluenet_forward.1} parent=1 // pred_check
      _
    $region11: #{qvaluenet_forward.1} parent=1 // pred_check_branch
      %21 = sbr.rel (0) target = $region13
    $region12: #{qvaluenet_forward.1} parent=1 // pred_region
      _
    $region13: #{qvaluenet_forward.1} parent=1 // pred_fallthru
      _
    // Predicated region
    $region14: #{qvaluenet_forward.1} parent=1 // pred_check
      _
    $region15: #{qvaluenet_forward.1} parent=1 // pred_check_branch
      %23 = sbr.rel (0) target = $region17
    $region16: #{qvaluenet_forward.1} parent=1 // pred_region
      _
    $region17: #{qvaluenet_forward.1} parent=1 // pred_fallthru
      _
    // Predicated region
    $region18: #{qvaluenet_forward.1} parent=1 // pred_check
      _
    $region19: #{qvaluenet_forward.1} parent=1 // pred_check_branch
      %25 = sbr.rel (0) target = $region21
    $region20: #{qvaluenet_forward.1} parent=1 // pred_region
      _
    $region21: #{qvaluenet_forward.1} parent=1 // pred_fallthru
      _
    // Predicated region
    $region22: #{qvaluenet_forward.1} parent=1 // pred_check
      _
    $region23: #{qvaluenet_forward.1} parent=1 // pred_check_branch
      %27 = sbr.rel (0) target = $region25
    $region24: #{qvaluenet_forward.1} parent=1 // pred_region
      %s29 = ssub.s32 2048, 2048
      %30 = vsyncadd [#allocation4], %s29
      %s31 = sshll.u32 [#allocation3], 4
      %s32 = int_to_ptr.vmem [resolvable:$true] %s31
      %37 = dma.hbm_to_vmem [thread:$0]  %s5, 2048, %s32, [#allocation4], 128, 128, 8
    $region25: #{qvaluenet_forward.1} parent=1 // pred_fallthru
      _
    // Predicated region
    $region26: #{qvaluenet_forward.1} parent=1 // pred_check
      _
    $region27: #{qvaluenet_forward.1} parent=1 // pred_check_branch
      %39 = sbr.rel (0) target = $region29
    $region28: #{qvaluenet_forward.1} parent=1 // pred_region
      _
    $region29: #{qvaluenet_forward.1} parent=1 // pred_fallthru
      _
    // Predicated region
    $region30: #{qvaluenet_forward.1} parent=1 // pred_check
      _
    $region31: #{qvaluenet_forward.1} parent=1 // pred_check_branch
      %41 = sbr.rel (0) target = $region33
    $region32: #{qvaluenet_forward.1} parent=1 // pred_region
      _
    $region33: #{qvaluenet_forward.1} parent=1 // pred_fallthru
      _
    // Predicated region
    $region34: #{qvaluenet_forward.1} parent=1 // pred_check
      _
    $region35: #{qvaluenet_forward.1} parent=1 // pred_check_branch
      %43 = sbr.rel (0) target = $region37
    $region36: #{qvaluenet_forward.1} parent=1 // pred_region
      _
    $region37: #{qvaluenet_forward.1} parent=1 // pred_fallthru
      _
    // Predicated region
    $region38: #{qvaluenet_forward.1} parent=1 // pred_check
      _
    $region39: #{qvaluenet_forward.1} parent=1 // pred_check_branch
      %45 = sbr.rel (0) target = $region41
    $region40: #{qvaluenet_forward.1} parent=1 // pred_region
      %46 = dma.done [#allocation4], 2048
    $region41: #{qvaluenet_forward.1} parent=1 // pred_fallthru
      _
    %v47 = vld [vmem:[%s0] sm:$0xff]
    %v48 = vld [vmem:[%s1] sm:$0xff]
    %v49 = vld [vmem:[%s3] sm:$0x1]
    %51 = vset.pattern.permute.xlu0 0
    %52 = vperm.xlu0 %51, %v48
    %v53 = vpop.permute.xlu0 %52
    %v56 = vlaneseq
    %v57 = vshrl.u32 %v56, 7
    %v58 = vsub.s32 0, %v57
    %v59 = vrot.slane %v49, %v58
    %v61 = vmul.f32 %v53, %v59
    %v62 = vld [vmem:[%s4] sm:$0x1]
    %v64 = vlaneseq
    %v65 = vshrl.u32 %v64, 7
    %v66 = vsub.s32 0, %v65
    %v67 = vrot.slane %v62, %v66
    %v69 = vadd.f32 %v61, %v67
    %v70 = vld [vmem:[%s2] sm:$0x1]
    %72 = vset.pattern.permute.xlu0 0
    %73 = vperm.xlu0 %72, %v47
    %v74 = vpop.permute.xlu0 %73
    %v76 = vlaneseq
    %v77 = vshrl.u32 %v76, 7
    %v78 = vsub.s32 0, %v77
    %v79 = vrot.slane %v70, %v78
    %v80 = vmul.f32 %v74, %v79
    %v81 = vadd.f32 %v69, %v80
    %v82 = vld [vmem:[%s2 + $0x1] sm:$0x1]
    %83 = vset.pattern.permute.xlu0 1
    %84 = vperm.xlu0 %83, %v47
    %v85 = vpop.permute.xlu0 %84
    %v87 = vlaneseq
    %v88 = vshrl.u32 %v87, 7
    %v89 = vsub.s32 0, %v88
    %v90 = vrot.slane %v82, %v89
    %v91 = vmul.f32 %v85, %v90
    %v92 = vadd.f32 %v81, %v91
    %v93 = vld [vmem:[%s2 + $0x2] sm:$0x1]
    %94 = vset.pattern.permute.xlu0 2
    %95 = vperm.xlu0 %94, %v47
    %v96 = vpop.permute.xlu0 %95
    %v98 = vlaneseq
    %v99 = vshrl.u32 %v98, 7
    %v100 = vsub.s32 0, %v99
    %v101 = vrot.slane %v93, %v100
    %v102 = vmul.f32 %v96, %v101
    %v103 = vadd.f32 %v92, %v102
    %v104 = vmax.f32 %v103, 0.0
    %v105 = vld [vmem:[#allocation3] sm:$0xff]
    %v106 = vld [vmem:[#allocation3 + $0x8] sm:$0xff]
    %v107 = vld [vmem:[#allocation3 + $0x10] sm:$0xff]
    %v108 = vld [vmem:[#allocation3 + $0x18] sm:$0xff]
    %v109 = vld [vmem:[#allocation3 + $0x20] sm:$0xff]
    %v110 = vld [vmem:[#allocation3 + $0x28] sm:$0xff]
    %v111 = vld [vmem:[#allocation3 + $0x30] sm:$0xff]
    %v112 = vld [vmem:[#allocation3 + $0x38] sm:$0xff]
    %v113 = vld [vmem:[#allocation3 + $0x40] sm:$0xff]
    %v114 = vld [vmem:[#allocation3 + $0x48] sm:$0xff]
    %v115 = vld [vmem:[#allocation3 + $0x50] sm:$0xff]
    %v116 = vld [vmem:[#allocation3 + $0x58] sm:$0xff]
    %v117 = vld [vmem:[#allocation3 + $0x60] sm:$0xff]
    %v118 = vld [vmem:[#allocation3 + $0x68] sm:$0xff]
    %v119 = vld [vmem:[#allocation3 + $0x70] sm:$0xff]
    %v120 = vld [vmem:[#allocation3 + $0x78] sm:$0xff]
    %v121 = vld [vmem:[%s6] sm:$0x1]
    %v123 = vlaneseq
    %v124 = vshrl.u32 %v123, 7
    %v125 = vsub.s32 0, %v124
    %v126 = vrot.slane %v121, %v125
    %128 = vmatprep.subr.mxu0 0.0
    %129 = vmatpush1.msra.mxu0 %v105
    %130 = vmatprep.subr.mxu0 0.0
    %131 = vmatpush1.msra.mxu0 %v106
    %132 = vmatprep.subr.mxu0 0.0
    %133 = vmatpush1.msra.mxu0 %v107
    %134 = vmatprep.subr.mxu0 0.0
    %135 = vmatpush1.msra.mxu0 %v108
    %136 = vmatprep.subr.mxu0 0.0
    %137 = vmatpush1.msra.mxu0 %v109
    %138 = vmatprep.subr.mxu0 0.0
    %139 = vmatpush1.msra.mxu0 %v110
    %140 = vmatprep.subr.mxu0 0.0
    %141 = vmatpush1.msra.mxu0 %v111
    %142 = vmatprep.subr.mxu0 0.0
    %143 = vmatpush1.msra.mxu0 %v112
    %144 = vmatprep.subr.mxu0 0.0
    %145 = vmatpush1.msra.mxu0 %v113
    %146 = vmatprep.subr.mxu0 0.0
    %147 = vmatpush1.msra.mxu0 %v114
    %148 = vmatprep.subr.mxu0 0.0
    %149 = vmatpush1.msra.mxu0 %v115
    %150 = vmatprep.subr.mxu0 0.0
    %151 = vmatpush1.msra.mxu0 %v116
    %152 = vmatprep.subr.mxu0 0.0
    %153 = vmatpush1.msra.mxu0 %v117
    %154 = vmatprep.subr.mxu0 0.0
    %155 = vmatpush1.msra.mxu0 %v118
    %156 = vmatprep.subr.mxu0 0.0
    %157 = vmatpush1.msra.mxu0 %v119
    %158 = vmatprep.subr.mxu0 0.0
    %159 = vmatpush1.msra.mxu0 %v120
    %160 = vmatprep.subr.mxu0 0.0
    %161 = vmatpush1.msra.mxu0 0.0
    %162 = vmatprep.subr.mxu0 0.0
    %163 = vmatpush1.msra.mxu0 0.0
    %164 = vmatprep.subr.mxu0 0.0
    %165 = vmatpush1.msra.mxu0 0.0
    %166 = vmatprep.subr.mxu0 0.0
    %167 = vmatpush1.msra.mxu0 0.0
    %168 = vmatprep.subr.mxu0 0.0
    %169 = vmatpush1.msra.mxu0 0.0
    %170 = vmatprep.subr.mxu0 0.0
    %171 = vmatpush1.msra.mxu0 0.0
    %172 = vmatprep.subr.mxu0 0.0
    %173 = vmatpush1.msra.mxu0 0.0
    %174 = vmatprep.subr.mxu0 0.0
    %175 = vmatpush1.msra.mxu0 0.0
    %176 = vmatprep.subr.mxu0 0.0
    %177 = vmatpush1.msra.mxu0 0.0
    %178 = vmatprep.subr.mxu0 0.0
    %179 = vmatpush1.msra.mxu0 0.0
    %180 = vmatprep.subr.mxu0 0.0
    %181 = vmatpush1.msra.mxu0 0.0
    %182 = vmatprep.subr.mxu0 0.0
    %183 = vmatpush1.msra.mxu0 0.0
    %184 = vmatprep.subr.mxu0 0.0
    %185 = vmatpush1.msra.mxu0 0.0
    %186 = vmatprep.subr.mxu0 0.0
    %187 = vmatpush1.msra.mxu0 0.0
    %188 = vmatprep.subr.mxu0 0.0
    %189 = vmatpush1.msra.mxu0 0.0
    %190 = vmatprep.subr.mxu0 0.0
    %191 = vmatpush1.msra.mxu0 0.0
    %192 = vmatprep.mubr.f32.mxu0 0.0
    %193 = vmatmul.mubr.f32.gmra.mrb[0].mxu0 %v104
    %v194 = vpop.f32.mrb[0].mxu0
    %v195 = vadd.f32 %v126, %v194
    %v196 = vpop.f32.mrb[0].mxu0
    %197 = vdwg.mxu0
    %v198 = vmax.f32 %v195, 0.0
    %v199 = vld [vmem:[%s7] sm:$0x1]
    %v201 = vlaneseq
    %v202 = vshrl.u32 %v201, 7
    %v203 = vsub.s32 0, %v202
    %v204 = vrot.slane %v199, %v203
    %v206 = vmul.f32 %v198, %v204
    %207 = vadd.xlane.f32.xlu0 %v206
    %v208 = vpop.xlane.xlu0 %207
    %s209 = sld [smem:[#allocation2]]
    %v210 = vstv %s209
    %v211 = vadd.f32 %v208, %v210
    %vm212 = vcmask 7168
    %213 = vst.msk [vmem:[%s9] sm:$0xff] %vm212, %v211
    // Predicated region
    $region42: #{qvaluenet_forward.1} parent=1 // pred_check
      _
    $region43: #{qvaluenet_forward.1} parent=1 // pred_check_branch
      %215 = sbr.rel (0) target = $region45
    $region44: #{qvaluenet_forward.1} parent=1 // pred_region
      _
    $region45: #{qvaluenet_forward.1} parent=1 // pred_fallthru
      _
    // Predicated region
    $region46: #{qvaluenet_forward.1} parent=1 // pred_check
      _
    $region47: #{qvaluenet_forward.1} parent=1 // pred_check_branch
      %217 = sbr.rel (0) target = $region49
    $region48: #{qvaluenet_forward.1} parent=1 // pred_region
      _
    $region49: #{qvaluenet_forward.1} parent=1 // pred_fallthru
      _
    %218 = vsyncpa [#allocation4], 1

</llo_original>
